<compile_context>
chip_gen: v7x
topology: tpu7x:2x2x1
jax: 0.10.0
libtpu: 0.0.40
codegen_flags: <defaults>
</compile_context>

<pallas_src>
import jax
import jax.numpy as jnp
from jax.experimental import pallas as pl
from jax.experimental.pallas import tpu as pltpu


def _build_gather_kernel(ids, dim, table_dtype, out_dtype):
    """Build a static-offset gather(+cast) kernel for a fixed tuple of token ids.

    ids         : tuple of python ints (already reduced mod vocab)
    dim         : embedding dimension
    table_dtype : dtype of the HBM embedding table
    out_dtype   : requested output dtype
    Returns (kernel_fn, scratch_shapes).
    """
    seq = len(ids)
    unique_ids = []
    pos_to_unique = []          # output row -> index into unique_ids
    for t in ids:
        if t in unique_ids:
            pos_to_unique.append(unique_ids.index(t))
        else:
            pos_to_unique.append(len(unique_ids))
            unique_ids.append(t)
    n_unique = len(unique_ids)
    same_dtype = jnp.dtype(out_dtype) == jnp.dtype(table_dtype)

    if same_dtype:
        # No-cast path: DMA each unique row straight into the first output
        # position that uses it; replicate duplicates with a VMEM row copy.
        # No staging buffer at all.
        first_pos = {}
        for i, u in enumerate(pos_to_unique):
            first_pos.setdefault(u, i)

        def kernel(table_ref, out_ref, sem_ref):
            copies = []
            for u, i in first_pos.items():
                cp = pltpu.make_async_copy(
                    table_ref.at[pl.ds(unique_ids[u], 1), :],
                    out_ref.at[pl.ds(i, 1), :],
                    sem_ref,                       # single shared DMA sem
                )
                cp.start()
                copies.append(cp)
            for cp in copies:
                cp.wait()
            # Replicate duplicated prompt tokens with cheap VMEM row copies.
            for i, u in enumerate(pos_to_unique):
                src = first_pos[u]
                if src != i:
                    out_ref[pl.ds(i, 1), :] = out_ref[pl.ds(src, 1), :]

        scratch_shapes = [pltpu.SemaphoreType.DMA]
        return kernel, scratch_shapes

    # Cast path: unique rows land in a small staging tile (table dtype),
    # then one dense cast + full-tile store assembles [seq, dim].
    pad_rows = max(8, ((n_unique + 7) // 8) * 8)   # keep staging sublane-dense

    def kernel(table_ref, out_ref, row_buf_ref, sem_ref):
        copies = []
        for j, uid in enumerate(unique_ids):
            cp = pltpu.make_async_copy(
                table_ref.at[pl.ds(uid, 1), :],
                row_buf_ref.at[pl.ds(j, 1), :],
                sem_ref,                            # single shared DMA sem
            )
            cp.start()
            copies.append(cp)
        for cp in copies:
            cp.wait()
        # Static-index row reads (unique rows read once), then one dense store.
        rows = [row_buf_ref[pl.ds(j, 1), :] for j in range(n_unique)]
        gathered = jnp.concatenate([rows[u] for u in pos_to_unique], axis=0)
        out_ref[...] = gathered.astype(out_ref.dtype)

    scratch_shapes = [
        pltpu.VMEM((pad_rows, dim), table_dtype),
        pltpu.SemaphoreType.DMA,
    ]
    return kernel, scratch_shapes


def token_embedding_pallas(prompt_ids, table, out_dtype):
    """prompt_ids: list/tuple of python ints (compile-time constants).
    table: [vocab, dim] embedding table (stays in HBM).
    Returns out_dtype[seq, dim] = table[prompt_ids].astype(out_dtype).
    """
    seq = len(prompt_ids)
    vocab, dim = table.shape
    ids = tuple(int(t) % vocab for t in prompt_ids)   # static bounds guarantee

    kernel, scratch_shapes = _build_gather_kernel(ids, dim, table.dtype, out_dtype)

    bytes_accessed = int(
        len(set(ids)) * dim * jnp.dtype(table.dtype).itemsize   # HBM row fetches
        + seq * dim * jnp.dtype(out_dtype).itemsize             # output writeback
    )
    return pl.pallas_call(
        kernel,
        out_shape=jax.ShapeDtypeStruct((seq, dim), out_dtype),
        in_specs=[pl.BlockSpec(memory_space=pl.ANY)],            # table stays in HBM
        out_specs=pl.BlockSpec(memory_space=pltpu.MemorySpace.VMEM),
        scratch_shapes=scratch_shapes,
        cost_estimate=pl.CostEstimate(
            flops=0, transcendentals=0, bytes_accessed=bytes_accessed),
    )(table)


class AggPromptLearner:
    """JAX/Pallas port of Agg_PromptLearner.

    __init__ builds `tokenized_prompts` deterministically (synthetic token ids
    standing in for clip.tokenize("A photo of a person."/"... vehicle.")) and
    computes `embedding = token_embedding(tokenized_prompts).astype(dtype)`
    with a Pallas HBM row-gather kernel.  forward() returns the cached
    embedding, exactly like the PyTorch module.
    """

    def __init__(self, num_class, dataset_name, dtype, token_embedding_table,
                 context_length=8):
        # Synthetic deterministic tokenization of the ctx_init prompt:
        # (SOT, "a", "photo", "of", "a", "person"/"vehicle", ".", EOT) padded.
        # TODO(synk): real clip.tokenize BPE has no Pallas equivalent; ids are synthetic.
        if dataset_name in ('VehicleID', 'veri'):
            prompt_ids = [49406, 320, 1125, 539, 320, 4289, 269, 49407]
        else:
            prompt_ids = [49406, 320, 1125, 539, 320, 2533, 269, 49407]
        vocab = token_embedding_table.shape[0]
        prompt_ids = [t % vocab for t in prompt_ids][:context_length]
        prompt_ids = prompt_ids + [0] * (context_length - len(prompt_ids))

        self.prompt_ids = tuple(prompt_ids)
        self.tokenized_prompts = jnp.asarray(prompt_ids, dtype=jnp.int32)[None, :]

        # Table stays in its native dtype / HBM; the (optional) cast to `dtype`
        # happens inside the kernel on the gathered rows only.
        emb = token_embedding_pallas(self.prompt_ids, token_embedding_table, dtype)
        self.embedding = emb[None, :, :]                          # [1, seq, dim]

    def forward(self):
        return self.embedding


if __name__ == "__main__":
    # Small shapes: vocab=256, embed_dim=128, context_length(seq)=8.
    key = jax.random.PRNGKey(0)
    vocab, dim, seq = 256, 128, 8

    # Deterministic synthetic token-embedding table (stands in for CLIP's
    # nn.Embedding weight).  Kept in fp32 / HBM; never cast as a whole.
    table = jax.random.normal(key, (vocab, dim), dtype=jnp.float32)

    # Cast path (fp32 table -> bf16 embedding), like CLIP fp16 inference.
    learner = AggPromptLearner(num_class=10, dataset_name='market',
                               dtype=jnp.bfloat16, token_embedding_table=table,
                               context_length=seq)
    out = jax.block_until_ready(learner.forward())
    ids = learner.tokenized_prompts[0]
    ref = table[ids].astype(jnp.bfloat16)[None, :, :]
    assert out.shape == (1, seq, dim), out.shape
    assert out.dtype == jnp.bfloat16, out.dtype
    assert jnp.array_equal(out.astype(jnp.float32), ref.astype(jnp.float32))

    # No-cast path (fp32 table -> fp32 embedding): staging buffer skipped,
    # rows DMA'd straight into the output tile.
    learner32 = AggPromptLearner(num_class=10, dataset_name='veri',
                                 dtype=jnp.float32, token_embedding_table=table,
                                 context_length=seq)
    out32 = jax.block_until_ready(learner32.forward())
    ids32 = learner32.tokenized_prompts[0]
    ref32 = table[ids32][None, :, :]
    assert out32.shape == (1, seq, dim), out32.shape
    assert out32.dtype == jnp.float32, out32.dtype
    assert jnp.array_equal(out32, ref32)

    print("KERNEL_OK")
</pallas_src>

<mosaic_0001>
module attributes {stable_mosaic.version = 11 : i64} {
  func.func @kernel(%arg0: memref<256x128xf32, #tpu.memory_space<any>>, %arg1: memref<8x128xbf16, #tpu.memory_space<vmem>>, %arg2: memref<8x128xf32, #tpu.memory_space<vmem>>, %arg3: memref<!tpu.dma_semaphore, #tpu.memory_space<semaphore_mem>>) attributes {dimension_semantics = [], scalar_prefetch = 0 : i64, scratch_operands = 2 : i64, tpu.core_type = #tpu.core_type<tc>} {
    %c254_i32 = arith.constant 254 : i32
    %c0_i32 = arith.constant 0 : i32
    %0 = tpu.memref_slice %arg0[%c254_i32, %c0_i32] : memref<256x128xf32, #tpu.memory_space<any>> -> memref<1x128xf32, #tpu.memory_space<any>>
    %c0_i32_0 = arith.constant 0 : i32
    %c0_i32_1 = arith.constant 0 : i32
    %1 = tpu.memref_slice %arg2[%c0_i32_0, %c0_i32_1] : memref<8x128xf32, #tpu.memory_space<vmem>> -> memref<1x128xf32, #tpu.memory_space<vmem>>
    tpu.enqueue_dma source(%0 : memref<1x128xf32, #tpu.memory_space<any>>) target(%1 : memref<1x128xf32, #tpu.memory_space<vmem>>) target_semaphore(%arg3 : memref<!tpu.dma_semaphore, #tpu.memory_space<semaphore_mem>>)
    %c64_i32 = arith.constant 64 : i32
    %c0_i32_2 = arith.constant 0 : i32
    %2 = tpu.memref_slice %arg0[%c64_i32, %c0_i32_2] : memref<256x128xf32, #tpu.memory_space<any>> -> memref<1x128xf32, #tpu.memory_space<any>>
    %c1_i32 = arith.constant 1 : i32
    %c0_i32_3 = arith.constant 0 : i32
    %3 = tpu.memref_slice %arg2[%c1_i32, %c0_i32_3] : memref<8x128xf32, #tpu.memory_space<vmem>> -> memref<1x128xf32, #tpu.memory_space<vmem>>
    tpu.enqueue_dma source(%2 : memref<1x128xf32, #tpu.memory_space<any>>) target(%3 : memref<1x128xf32, #tpu.memory_space<vmem>>) target_semaphore(%arg3 : memref<!tpu.dma_semaphore, #tpu.memory_space<semaphore_mem>>)
    %c101_i32 = arith.constant 101 : i32
    %c0_i32_4 = arith.constant 0 : i32
    %4 = tpu.memref_slice %arg0[%c101_i32, %c0_i32_4] : memref<256x128xf32, #tpu.memory_space<any>> -> memref<1x128xf32, #tpu.memory_space<any>>
    %c2_i32 = arith.constant 2 : i32
    %c0_i32_5 = arith.constant 0 : i32
    %5 = tpu.memref_slice %arg2[%c2_i32, %c0_i32_5] : memref<8x128xf32, #tpu.memory_space<vmem>> -> memref<1x128xf32, #tpu.memory_space<vmem>>
    tpu.enqueue_dma source(%4 : memref<1x128xf32, #tpu.memory_space<any>>) target(%5 : memref<1x128xf32, #tpu.memory_space<vmem>>) target_semaphore(%arg3 : memref<!tpu.dma_semaphore, #tpu.memory_space<semaphore_mem>>)
    %c27_i32 = arith.constant 27 : i32
    %c0_i32_6 = arith.constant 0 : i32
    %6 = tpu.memref_slice %arg0[%c27_i32, %c0_i32_6] : memref<256x128xf32, #tpu.memory_space<any>> -> memref<1x128xf32, #tpu.memory_space<any>>
    %c3_i32 = arith.constant 3 : i32
    %c0_i32_7 = arith.constant 0 : i32
    %7 = tpu.memref_slice %arg2[%c3_i32, %c0_i32_7] : memref<8x128xf32, #tpu.memory_space<vmem>> -> memref<1x128xf32, #tpu.memory_space<vmem>>
    tpu.enqueue_dma source(%6 : memref<1x128xf32, #tpu.memory_space<any>>) target(%7 : memref<1x128xf32, #tpu.memory_space<vmem>>) target_semaphore(%arg3 : memref<!tpu.dma_semaphore, #tpu.memory_space<semaphore_mem>>)
    %c229_i32 = arith.constant 229 : i32
    %c0_i32_8 = arith.constant 0 : i32
    %8 = tpu.memref_slice %arg0[%c229_i32, %c0_i32_8] : memref<256x128xf32, #tpu.memory_space<any>> -> memref<1x128xf32, #tpu.memory_space<any>>
    %c4_i32 = arith.constant 4 : i32
    %c0_i32_9 = arith.constant 0 : i32
    %9 = tpu.memref_slice %arg2[%c4_i32, %c0_i32_9] : memref<8x128xf32, #tpu.memory_space<vmem>> -> memref<1x128xf32, #tpu.memory_space<vmem>>
    tpu.enqueue_dma source(%8 : memref<1x128xf32, #tpu.memory_space<any>>) target(%9 : memref<1x128xf32, #tpu.memory_space<vmem>>) target_semaphore(%arg3 : memref<!tpu.dma_semaphore, #tpu.memory_space<semaphore_mem>>)
    %c13_i32 = arith.constant 13 : i32
    %c0_i32_10 = arith.constant 0 : i32
    %10 = tpu.memref_slice %arg0[%c13_i32, %c0_i32_10] : memref<256x128xf32, #tpu.memory_space<any>> -> memref<1x128xf32, #tpu.memory_space<any>>
    %c5_i32 = arith.constant 5 : i32
    %c0_i32_11 = arith.constant 0 : i32
    %11 = tpu.memref_slice %arg2[%c5_i32, %c0_i32_11] : memref<8x128xf32, #tpu.memory_space<vmem>> -> memref<1x128xf32, #tpu.memory_space<vmem>>
    tpu.enqueue_dma source(%10 : memref<1x128xf32, #tpu.memory_space<any>>) target(%11 : memref<1x128xf32, #tpu.memory_space<vmem>>) target_semaphore(%arg3 : memref<!tpu.dma_semaphore, #tpu.memory_space<semaphore_mem>>)
    %c255_i32 = arith.constant 255 : i32
    %c0_i32_12 = arith.constant 0 : i32
    %12 = tpu.memref_slice %arg0[%c255_i32, %c0_i32_12] : memref<256x128xf32, #tpu.memory_space<any>> -> memref<1x128xf32, #tpu.memory_space<any>>
    %c6_i32 = arith.constant 6 : i32
    %c0_i32_13 = arith.constant 0 : i32
    %13 = tpu.memref_slice %arg2[%c6_i32, %c0_i32_13] : memref<8x128xf32, #tpu.memory_space<vmem>> -> memref<1x128xf32, #tpu.memory_space<vmem>>
    tpu.enqueue_dma source(%12 : memref<1x128xf32, #tpu.memory_space<any>>) target(%13 : memref<1x128xf32, #tpu.memory_space<vmem>>) target_semaphore(%arg3 : memref<!tpu.dma_semaphore, #tpu.memory_space<semaphore_mem>>)
    %c254_i32_14 = arith.constant 254 : i32
    %c0_i32_15 = arith.constant 0 : i32
    %14 = tpu.memref_slice %arg0[%c254_i32_14, %c0_i32_15] : memref<256x128xf32, #tpu.memory_space<any>> -> memref<1x128xf32, #tpu.memory_space<any>>
    %c0_i32_16 = arith.constant 0 : i32
    %c0_i32_17 = arith.constant 0 : i32
    %15 = tpu.memref_slice %arg2[%c0_i32_16, %c0_i32_17] : memref<8x128xf32, #tpu.memory_space<vmem>> -> memref<1x128xf32, #tpu.memory_space<vmem>>
    tpu.wait_dma2 semaphore(%arg3 : memref<!tpu.dma_semaphore, #tpu.memory_space<semaphore_mem>>) src(%14 : memref<1x128xf32, #tpu.memory_space<any>>) dst(%15 : memref<1x128xf32, #tpu.memory_space<vmem>>)
    %c64_i32_18 = arith.constant 64 : i32
    %c0_i32_19 = arith.constant 0 : i32
    %16 = tpu.memref_slice %arg0[%c64_i32_18, %c0_i32_19] : memref<256x128xf32, #tpu.memory_space<any>> -> memref<1x128xf32, #tpu.memory_space<any>>
    %c1_i32_20 = arith.constant 1 : i32
    %c0_i32_21 = arith.constant 0 : i32
    %17 = tpu.memref_slice %arg2[%c1_i32_20, %c0_i32_21] : memref<8x128xf32, #tpu.memory_space<vmem>> -> memref<1x128xf32, #tpu.memory_space<vmem>>
    tpu.wait_dma2 semaphore(%arg3 : memref<!tpu.dma_semaphore, #tpu.memory_space<semaphore_mem>>) src(%16 : memref<1x128xf32, #tpu.memory_space<any>>) dst(%17 : memref<1x128xf32, #tpu.memory_space<vmem>>)
    %c101_i32_22 = arith.constant 101 : i32
    %c0_i32_23 = arith.constant 0 : i32
    %18 = tpu.memref_slice %arg0[%c101_i32_22, %c0_i32_23] : memref<256x128xf32, #tpu.memory_space<any>> -> memref<1x128xf32, #tpu.memory_space<any>>
    %c2_i32_24 = arith.constant 2 : i32
    %c0_i32_25 = arith.constant 0 : i32
    %19 = tpu.memref_slice %arg2[%c2_i32_24, %c0_i32_25] : memref<8x128xf32, #tpu.memory_space<vmem>> -> memref<1x128xf32, #tpu.memory_space<vmem>>
    tpu.wait_dma2 semaphore(%arg3 : memref<!tpu.dma_semaphore, #tpu.memory_space<semaphore_mem>>) src(%18 : memref<1x128xf32, #tpu.memory_space<any>>) dst(%19 : memref<1x128xf32, #tpu.memory_space<vmem>>)
    %c27_i32_26 = arith.constant 27 : i32
    %c0_i32_27 = arith.constant 0 : i32
    %20 = tpu.memref_slice %arg0[%c27_i32_26, %c0_i32_27] : memref<256x128xf32, #tpu.memory_space<any>> -> memref<1x128xf32, #tpu.memory_space<any>>
    %c3_i32_28 = arith.constant 3 : i32
    %c0_i32_29 = arith.constant 0 : i32
    %21 = tpu.memref_slice %arg2[%c3_i32_28, %c0_i32_29] : memref<8x128xf32, #tpu.memory_space<vmem>> -> memref<1x128xf32, #tpu.memory_space<vmem>>
    tpu.wait_dma2 semaphore(%arg3 : memref<!tpu.dma_semaphore, #tpu.memory_space<semaphore_mem>>) src(%20 : memref<1x128xf32, #tpu.memory_space<any>>) dst(%21 : memref<1x128xf32, #tpu.memory_space<vmem>>)
    %c229_i32_30 = arith.constant 229 : i32
    %c0_i32_31 = arith.constant 0 : i32
    %22 = tpu.memref_slice %arg0[%c229_i32_30, %c0_i32_31] : memref<256x128xf32, #tpu.memory_space<any>> -> memref<1x128xf32, #tpu.memory_space<any>>
    %c4_i32_32 = arith.constant 4 : i32
    %c0_i32_33 = arith.constant 0 : i32
    %23 = tpu.memref_slice %arg2[%c4_i32_32, %c0_i32_33] : memref<8x128xf32, #tpu.memory_space<vmem>> -> memref<1x128xf32, #tpu.memory_space<vmem>>
    tpu.wait_dma2 semaphore(%arg3 : memref<!tpu.dma_semaphore, #tpu.memory_space<semaphore_mem>>) src(%22 : memref<1x128xf32, #tpu.memory_space<any>>) dst(%23 : memref<1x128xf32, #tpu.memory_space<vmem>>)
    %c13_i32_34 = arith.constant 13 : i32
    %c0_i32_35 = arith.constant 0 : i32
    %24 = tpu.memref_slice %arg0[%c13_i32_34, %c0_i32_35] : memref<256x128xf32, #tpu.memory_space<any>> -> memref<1x128xf32, #tpu.memory_space<any>>
    %c5_i32_36 = arith.constant 5 : i32
    %c0_i32_37 = arith.constant 0 : i32
    %25 = tpu.memref_slice %arg2[%c5_i32_36, %c0_i32_37] : memref<8x128xf32, #tpu.memory_space<vmem>> -> memref<1x128xf32, #tpu.memory_space<vmem>>
    tpu.wait_dma2 semaphore(%arg3 : memref<!tpu.dma_semaphore, #tpu.memory_space<semaphore_mem>>) src(%24 : memref<1x128xf32, #tpu.memory_space<any>>) dst(%25 : memref<1x128xf32, #tpu.memory_space<vmem>>)
    %c255_i32_38 = arith.constant 255 : i32
    %c0_i32_39 = arith.constant 0 : i32
    %26 = tpu.memref_slice %arg0[%c255_i32_38, %c0_i32_39] : memref<256x128xf32, #tpu.memory_space<any>> -> memref<1x128xf32, #tpu.memory_space<any>>
    %c6_i32_40 = arith.constant 6 : i32
    %c0_i32_41 = arith.constant 0 : i32
    %27 = tpu.memref_slice %arg2[%c6_i32_40, %c0_i32_41] : memref<8x128xf32, #tpu.memory_space<vmem>> -> memref<1x128xf32, #tpu.memory_space<vmem>>
    tpu.wait_dma2 semaphore(%arg3 : memref<!tpu.dma_semaphore, #tpu.memory_space<semaphore_mem>>) src(%26 : memref<1x128xf32, #tpu.memory_space<any>>) dst(%27 : memref<1x128xf32, #tpu.memory_space<vmem>>)
    %c0 = arith.constant 0 : index
    %c0_42 = arith.constant 0 : index
    %28 = vector.load %arg2[%c0, %c0_42] : memref<8x128xf32, #tpu.memory_space<vmem>>, vector<1x128xf32>
    %c1 = arith.constant 1 : index
    %c0_43 = arith.constant 0 : index
    %29 = vector.load %arg2[%c1, %c0_43] : memref<8x128xf32, #tpu.memory_space<vmem>>, vector<1x128xf32>
    %c2 = arith.constant 2 : index
    %c0_44 = arith.constant 0 : index
    %30 = vector.load %arg2[%c2, %c0_44] : memref<8x128xf32, #tpu.memory_space<vmem>>, vector<1x128xf32>
    %c3 = arith.constant 3 : index
    %c0_45 = arith.constant 0 : index
    %31 = vector.load %arg2[%c3, %c0_45] : memref<8x128xf32, #tpu.memory_space<vmem>>, vector<1x128xf32>
    %c4 = arith.constant 4 : index
    %c0_46 = arith.constant 0 : index
    %32 = vector.load %arg2[%c4, %c0_46] : memref<8x128xf32, #tpu.memory_space<vmem>>, vector<1x128xf32>
    %c5 = arith.constant 5 : index
    %c0_47 = arith.constant 0 : index
    %33 = vector.load %arg2[%c5, %c0_47] : memref<8x128xf32, #tpu.memory_space<vmem>>, vector<1x128xf32>
    %c6 = arith.constant 6 : index
    %c0_48 = arith.constant 0 : index
    %34 = vector.load %arg2[%c6, %c0_48] : memref<8x128xf32, #tpu.memory_space<vmem>>, vector<1x128xf32>
    %35 = tpu.concatenate %28, %29, %30, %31, %29, %32, %33, %34 in 0 : vector<1x128xf32>, vector<1x128xf32>, vector<1x128xf32>, vector<1x128xf32>, vector<1x128xf32>, vector<1x128xf32>, vector<1x128xf32>, vector<1x128xf32> -> vector<8x128xf32>
    %36 = arith.truncf %35 : vector<8x128xf32> to vector<8x128xbf16>
    %c0_49 = arith.constant 0 : index
    %c0_50 = arith.constant 0 : index
    %37 = vector.load %arg1[%c0_49, %c0_50] : memref<8x128xbf16, #tpu.memory_space<vmem>>, vector<8x128xbf16>
    tpu.vector_store %arg1[%c0_49, %c0_50], %36 {strides = array<i32>} : memref<8x128xbf16, #tpu.memory_space<vmem>>, vector<8x128xbf16>,
    return
  }
}

</mosaic_0001>

<llo_original>
// kernel: tpu_custom_call.1
$region0: #{tpu_custom_call.1}
  #allocation0 [shape = 'u32[]', space=smem, size = 0x4, offset = 0x4, fixed_abs, tag = 'smem constant byte address 0x4 - core index']
  #allocation1 [shape = 'u32[144,128]{1,0:T(1,128)}', space=vmem, size = 0x12000, scoped, tag = 'internal scratch']
  #allocation2 [shape = 'f32[8,128]{1,0:T(8,128)}', space=vmem, size = 0x1000, scoped, tag = 'scratch operand']
  #allocation3 [shape = 's32[1]{0}', space=sflag, size = 0x4, scoped, tag = 'scratch operand']
  #allocation6 [shape = 's32[]', space=sflag, size = 0x4, offset = 0, fixed_abs, tag = 'sflag constant byte address 0x0 - dummy sync flag']
  #allocation7 [shape = 's32[]', space=sflag, size = 0x4, offset = 0, fixed_abs, tag = 'sflag constant byte address 0x0 - dummy sync flag']
  #allocation8 [shape = 'u32[]', space=smem, size = 0x4, offset = 0x44, fixed_abs, tag = 'smem constant byte address 0x44 - assertion arg 0']
  #allocation9 [shape = 'u32[]', space=smem, size = 0x4, offset = 0x48, fixed_abs, tag = 'smem constant byte address 0x48 - assertion arg 1']
  #allocation10 [shape = 's32[]', space=sflag, size = 0x4, offset = 0, fixed_abs, tag = 'sflag constant byte address 0x0 - dummy sync flag']
  #allocation11 [shape = 's32[]', space=sflag, size = 0x4, offset = 0, fixed_abs, tag = 'sflag constant byte address 0x0 - dummy sync flag']
  #allocation12 [shape = 's32[]', space=sflag, size = 0x4, offset = 0, fixed_abs, tag = 'sflag constant byte address 0x0 - dummy sync flag']
  #allocation13 [shape = 's32[]', space=sflag, size = 0x4, offset = 0, fixed_abs, tag = 'sflag constant byte address 0x0 - dummy sync flag']
  #allocation14 [shape = 's32[]', space=sflag, size = 0x4, offset = 0, fixed_abs, tag = 'sflag constant byte address 0x0 - dummy sync flag']
  #allocation15 [shape = 's32[]', space=sflag, size = 0x4, offset = 0, fixed_abs, tag = 'sflag constant byte address 0x0 - dummy sync flag']
  #allocation16 [shape = 's32[]', space=sflag, size = 0x4, offset = 0, fixed_abs, tag = 'sflag constant byte address 0x0 - dummy sync flag']
  #allocation17 [shape = 's32[]', space=sflag, size = 0x4, offset = 0, fixed_abs, tag = 'sflag constant byte address 0x0 - dummy sync flag']
  #allocation18 [shape = 's32[]', space=sflag, size = 0x4, offset = 0, fixed_abs, tag = 'sflag constant byte address 0x0 - dummy sync flag']
  #allocation19 [shape = 's32[]', space=sflag, size = 0x4, offset = 0, fixed_abs, tag = 'sflag constant byte address 0x0 - dummy sync flag']
  #allocation20 [shape = 's32[]', space=sflag, size = 0x4, offset = 0, fixed_abs, tag = 'sflag constant byte address 0x0 - dummy sync flag']
  #allocation21 [shape = 's32[]', space=sflag, size = 0x4, offset = 0, fixed_abs, tag = 'sflag constant byte address 0x0 - dummy sync flag']
  %s0 = inlined_call_operand.hbm [shape: f32[256,128], index: 0, kind: input, shape index: {}]
  %s1 = inlined_call_operand.hbm [shape: bf16[8,128], index: 1, kind: output, shape index: {}]
  %s2 = sld [smem:[#allocation0]]
  $region38: #{tpu_custom_call.1} parent=0
    _
  %s4 = ssub.s32 1, %s2
  %s5 = scalar_select 0, %s4, %s2
  $region1: #{tpu_custom_call.1} parent=0
    #allocation4 [shape = 'u8[2048]{0}', space=vmem, size = 0x800, scoped, tag = 'output window, operand 0, single buffered']
    #allocation5 [shape = 's32[1]{0}', space=sflag, size = 0x4, scoped, tag = 'scoped memory for tpu_custom_call.1']
    %6 = vsyncpa [#allocation5], 0
    %s7 = scalar_lea.hbm %s0, 4064
    // Predicated region
    $region2: #{tpu_custom_call.1} parent=1 // pred_check
      _
    $region3: #{tpu_custom_call.1} parent=1 // pred_check_branch
      %9 = sbr.rel target = $region5
    $region4: #{tpu_custom_call.1} parent=1 // pred_region
      %10 = sst [smem:[#allocation8]] [#allocation7]
      %11 = sst [smem:[#allocation9]] [#allocation6]
    $region5: #{tpu_custom_call.1} parent=1 // pred_fallthru
      _
    %13 = shalt.err (0)
    %s15 = sshll.u32 [#allocation2], 4
    %s16 = int_to_ptr.vmem [resolvable:$true] %s15
    %18 = dma.hbm_to_vmem [thread:$0]  %s7, 16, %s16, [#allocation3]
    %s19 = scalar_lea.hbm %s0, 1024
    %s20 = scalar_lea.vmem [#allocation2], 1
    // Predicated region
    $region6: #{tpu_custom_call.1} parent=1 // pred_check
      _
    $region7: #{tpu_custom_call.1} parent=1 // pred_check_branch
      %22 = sbr.rel target = $region9
    $region8: #{tpu_custom_call.1} parent=1 // pred_region
      %23 = sst [smem:[#allocation8]] [#allocation11]
      %24 = sst [smem:[#allocation9]] [#allocation10]
    $region9: #{tpu_custom_call.1} parent=1 // pred_fallthru
      _
    %26 = shalt.err (0)
    %s28 = sshll.u32 %s20, 4
    %s29 = int_to_ptr.vmem [resolvable:$true] %s28
    %31 = dma.hbm_to_vmem [thread:$0]  %s19, 16, %s29, [#allocation3]
    %s32 = scalar_lea.hbm %s0, 1616
    %s33 = scalar_lea.vmem [#allocation2], 2
    // Predicated region
    $region10: #{tpu_custom_call.1} parent=1 // pred_check
      _
    $region11: #{tpu_custom_call.1} parent=1 // pred_check_branch
      %35 = sbr.rel target = $region13
    $region12: #{tpu_custom_call.1} parent=1 // pred_region
      %36 = sst [smem:[#allocation8]] [#allocation13]
      %37 = sst [smem:[#allocation9]] [#allocation12]
    $region13: #{tpu_custom_call.1} parent=1 // pred_fallthru
      _
    %39 = shalt.err (0)
    %s41 = sshll.u32 %s33, 4
    %s42 = int_to_ptr.vmem [resolvable:$true] %s41
    %44 = dma.hbm_to_vmem [thread:$0]  %s32, 16, %s42, [#allocation3]
    %s45 = scalar_lea.hbm %s0, 432
    %s46 = scalar_lea.vmem [#allocation2], 3
    // Predicated region
    $region14: #{tpu_custom_call.1} parent=1 // pred_check
      _
    $region15: #{tpu_custom_call.1} parent=1 // pred_check_branch
      %48 = sbr.rel target = $region17
    $region16: #{tpu_custom_call.1} parent=1 // pred_region
      %49 = sst [smem:[#allocation8]] [#allocation15]
      %50 = sst [smem:[#allocation9]] [#allocation14]
    $region17: #{tpu_custom_call.1} parent=1 // pred_fallthru
      _
    %52 = shalt.err (0)
    %s54 = sshll.u32 %s46, 4
    %s55 = int_to_ptr.vmem [resolvable:$true] %s54
    %57 = dma.hbm_to_vmem [thread:$0]  %s45, 16, %s55, [#allocation3]
    %s58 = scalar_lea.hbm %s0, 3664
    %s59 = scalar_lea.vmem [#allocation2], 4
    // Predicated region
    $region18: #{tpu_custom_call.1} parent=1 // pred_check
      _
    $region19: #{tpu_custom_call.1} parent=1 // pred_check_branch
      %61 = sbr.rel target = $region21
    $region20: #{tpu_custom_call.1} parent=1 // pred_region
      %62 = sst [smem:[#allocation8]] [#allocation17]
      %63 = sst [smem:[#allocation9]] [#allocation16]
    $region21: #{tpu_custom_call.1} parent=1 // pred_fallthru
      _
    %65 = shalt.err (0)
    %s67 = sshll.u32 %s59, 4
    %s68 = int_to_ptr.vmem [resolvable:$true] %s67
    %70 = dma.hbm_to_vmem [thread:$0]  %s58, 16, %s68, [#allocation3]
    %s71 = scalar_lea.hbm %s0, 208
    %s72 = scalar_lea.vmem [#allocation2], 5
    // Predicated region
    $region22: #{tpu_custom_call.1} parent=1 // pred_check
      _
    $region23: #{tpu_custom_call.1} parent=1 // pred_check_branch
      %74 = sbr.rel target = $region25
    $region24: #{tpu_custom_call.1} parent=1 // pred_region
      %75 = sst [smem:[#allocation8]] [#allocation19]
      %76 = sst [smem:[#allocation9]] [#allocation18]
    $region25: #{tpu_custom_call.1} parent=1 // pred_fallthru
      _
    %78 = shalt.err (0)
    %s80 = sshll.u32 %s72, 4
    %s81 = int_to_ptr.vmem [resolvable:$true] %s80
    %83 = dma.hbm_to_vmem [thread:$0]  %s71, 16, %s81, [#allocation3]
    %s84 = scalar_lea.hbm %s0, 4080
    %s85 = scalar_lea.vmem [#allocation2], 6
    // Predicated region
    $region26: #{tpu_custom_call.1} parent=1 // pred_check
      _
    $region27: #{tpu_custom_call.1} parent=1 // pred_check_branch
      %87 = sbr.rel target = $region29
    $region28: #{tpu_custom_call.1} parent=1 // pred_region
      %88 = sst [smem:[#allocation8]] [#allocation21]
      %89 = sst [smem:[#allocation9]] [#allocation20]
    $region29: #{tpu_custom_call.1} parent=1 // pred_fallthru
      _
    %91 = shalt.err (0)
    %s93 = sshll.u32 %s85, 4
    %s94 = int_to_ptr.vmem [resolvable:$true] %s93
    %96 = dma.hbm_to_vmem [thread:$0]  %s84, 16, %s94, [#allocation3]
    %s97 = smul.u32 1, 1
    %s98 = sshll.u32 %s97, 4
    %99 = dma.done [#allocation3], %s98
    %s100 = sshll.u32 %s97, 4
    %101 = dma.done [#allocation3], %s100
    %s102 = sshll.u32 %s97, 4
    %103 = dma.done [#allocation3], %s102
    %s104 = sshll.u32 %s97, 4
    %105 = dma.done [#allocation3], %s104
    %s106 = sshll.u32 %s97, 4
    %107 = dma.done [#allocation3], %s106
    %s108 = sshll.u32 %s97, 4
    %109 = dma.done [#allocation3], %s108
    %s110 = sshll.u32 %s97, 4
    %111 = dma.done [#allocation3], %s110
    %v112 = vld [vmem:[#allocation2] sm:$0x1]
    %v113 = vld [vmem:[#allocation2 + $0x1] sm:$0x1]
    %v114 = vld [vmem:[#allocation2 + $0x2] sm:$0x1]
    %v115 = vld [vmem:[#allocation2 + $0x3] sm:$0x1]
    %v116 = vld [vmem:[#allocation2 + $0x4] sm:$0x1]
    %v117 = vld [vmem:[#allocation2 + $0x5] sm:$0x1]
    %v118 = vld [vmem:[#allocation2 + $0x6] sm:$0x1]
    %v120 = vrot.slane %v113, 7
    %v123 = vrot.slane %v114, 6
    %v126 = vrot.slane %v115, 5
    %v128 = vrot.slane %v113, 4
    %v131 = vrot.slane %v116, 3
    %v134 = vrot.slane %v117, 2
    %v137 = vrot.slane %v118, 1
    %vm139 = vcmask 1040384
    %v140 = vsel %vm139, %v112, %v120
    %vm141 = vcmask 1041408
    %v142 = vsel %vm141, %v140, %v123
    %vm143 = vcmask 1042432
    %v144 = vsel %vm143, %v142, %v126
    %vm145 = vcmask 1043456
    %v146 = vsel %vm145, %v144, %v128
    %vm147 = vcmask 1044480
    %v148 = vsel %vm147, %v146, %v131
    %vm149 = vcmask 1045504
    %v150 = vsel %vm149, %v148, %v134
    %vm151 = vcmask 1046528
    %v152 = vsel %vm151, %v150, %v137
    %v153 = vpack.c.bf16 %v152, %v152
    %154 = vst [vmem:[#allocation4] sm:$0xf] %v153
    // Predicated region
    $region30: #{tpu_custom_call.1} parent=1 // pred_check
      _
    $region31: #{tpu_custom_call.1} parent=1 // pred_check_branch
      %156 = sbr.rel (0) target = $region33
    $region32: #{tpu_custom_call.1} parent=1 // pred_region
      %s158 = ssub.s32 64, 64
      %159 = vsyncadd [#allocation5], %s158
      %s161 = sshll.u32 [#allocation4], 4
      %s162 = int_to_ptr.vmem [resolvable:$true] %s161
      %164 = dma.vmem_to_hbm [thread:$0]  %s162, 64, %s1, [#allocation5]
    $region33: #{tpu_custom_call.1} parent=1 // pred_fallthru
      _
    // Predicated region
    $region34: #{tpu_custom_call.1} parent=1 // pred_check
      _
    $region35: #{tpu_custom_call.1} parent=1 // pred_check_branch
      %166 = sbr.rel (0) target = $region37
    $region36: #{tpu_custom_call.1} parent=1 // pred_region
      %167 = dma.done [#allocation5], 64
    $region37: #{tpu_custom_call.1} parent=1 // pred_fallthru
      _
    %168 = vsyncpa [#allocation5], 1
  %169 = vsyncmov [#allocation3]
  %s170 = vpop.sfrf %169
  %p171 = scmp.eq.s32.totalorder %s170, 0
  %p172 = pneg %p171
  %174 = shalt.err (%p172)

</llo_original>
